<compile_context>
chip_gen: v7x
topology: tpu7x:2x2x1
jax: 0.10.0
libtpu: 0.0.40
codegen_flags: <defaults>
</compile_context>

<pallas_src>
import jax
import jax.numpy as jnp
from jax.experimental import pallas as pl
from jax.experimental.pallas import tpu as pltpu

_LANE = 128


def _round_up(x: int, m: int) -> int:
    return (x + m - 1) // m * m


def _cdiv(a: int, b: int) -> int:
    return (a + b - 1) // b


# --------------------------------------------------------------------------- #
# Kernel
# --------------------------------------------------------------------------- #
def _policy_kernel(xa_ref, w1a_ref, w2_ref, b2_ref, o_ref):
    """One batch tile, feature-major (batch lives on the lane axis).

    xa_ref : [in_dim+1, TB]  matmul dtype; last row is all-ones (bias input)
    w1a_ref: [H, in_dim+1]   matmul dtype; last column is b1 (bias folded)
    w2_ref : [out_dim, H]    matmul dtype
    b2_ref : [out_dim, 1]    f32
    o_ref  : [out_dim, TB]   f32 probabilities
    """
    # fc1 (+ folded b1) on the MXU with f32 accumulation.
    h = jnp.dot(w1a_ref[...], xa_ref[...], preferred_element_type=jnp.float32)
    # Downcast first, then ReLU in the matmul dtype (identical numerics;
    # halves the elementwise pass on chips with bf16 VALUs).
    hb = jnp.maximum(h.astype(w2_ref.dtype), 0)                     # [H, TB]

    logits = jnp.dot(w2_ref[...], hb, preferred_element_type=jnp.float32)
    logits = logits + b2_ref[...]                                   # [out, TB]

    out_dim = o_ref.shape[0]
    if out_dim == 2:
        # 2-class softmax == sigmoid of the logit difference: no cross-lane
        # reduction.  Exact division keeps probabilities in [0, 1] and rows
        # summing to 1 (safe for a downstream categorical sampler).
        d = logits[1:2, :] - logits[0:1, :]                         # [1, TB]
        p1 = 1.0 / (1.0 + jnp.exp(-d))
        o_ref[0:1, :] = (1.0 - p1).astype(o_ref.dtype)              # direct,
        o_ref[1:2, :] = p1.astype(o_ref.dtype)                      # lane-dense
    else:
        # Generic numerically-stable softmax over the class (sublane) axis.
        m = jnp.max(logits, axis=0, keepdims=True)
        e = jnp.exp(logits - m)
        o_ref[...] = (e / jnp.sum(e, axis=0, keepdims=True)).astype(o_ref.dtype)


# --------------------------------------------------------------------------- #
# Tiling / wrappers
# --------------------------------------------------------------------------- #
def _pick_batch_tile(b_padded: int, tb_max: int):
    """Lane-aligned batch tile + grid size.

    Tiles are as large as the VMEM budget allows (per-grid-step overhead
    ~0.35us is comparable to the tiny per-tile body).  Once the batch is big
    enough, force >= 2 grid steps so the "parallel" batch axis actually shards
    across v7x's two TensorCores.
    """
    min_tiles = 2 if b_padded >= 1024 else 1
    n_tiles = max(_cdiv(b_padded, tb_max), min_tiles)
    tb = _round_up(_cdiv(b_padded, n_tiles), _LANE)
    n_tiles = _cdiv(b_padded, tb)
    return tb, n_tiles


def pack_params(w1, b1, w2, b2, matmul_dtype=jnp.bfloat16):
    """One-time packing (once per policy update in an RL loop): fold b1 into
    W1 as an extra column, cast MXU operands, keep b2 in f32."""
    H = w1.shape[0]
    out_dim = w2.shape[0]
    w1a = jnp.concatenate([w1, b1.reshape(H, 1)], axis=1).astype(matmul_dtype)
    w2m = w2.astype(matmul_dtype)
    b2c = b2.reshape(out_dim, 1).astype(jnp.float32)
    return w1a, w2m, b2c


def prepare_observations(x, matmul_dtype=jnp.bfloat16):
    """Feature-major observations with the all-ones bias row appended.
    In a real RL pipeline, produce observations directly in this layout so the
    transpose/cast fuses into the producer (no extra HBM round trip)."""
    B = x.shape[0]
    return jnp.concatenate(
        [x.T, jnp.ones((1, B), x.dtype)], axis=0).astype(matmul_dtype)


def policy_probs_feature_major(xa, w1a, w2m, b2c, *, tb_max=16384):
    """Core Pallas forward on feature-major inputs.

    xa : [in_dim+1, B] (matmul dtype, last row all-ones), w1a: [H, in_dim+1],
    w2m: [out_dim, H], b2c: [out_dim, 1] f32.
    Returns probabilities [out_dim, B] f32 (feature-major).
    """
    aug_in, B = xa.shape
    H = w1a.shape[0]
    out_dim = w2m.shape[0]

    # Pad the batch to a whole number of lane-aligned tiles: every block is
    # full, so there are no out-of-bounds lanes (no garbage exp / NaN) and
    # every store is an unmasked, lane-dense vst.
    b_padded = _round_up(max(B, _LANE), _LANE)
    tb, n_tiles = _pick_batch_tile(b_padded, tb_max)
    b_padded = tb * n_tiles
    if b_padded != B:
        xa = jnp.pad(xa, ((0, 0), (0, b_padded - B)))   # zero cols -> p=[.5,.5]

    flops = 2 * b_padded * H * (aug_in + out_dim)
    transcendentals = b_padded * (1 if out_dim == 2 else out_dim)
    bytes_accessed = (xa.size * xa.dtype.itemsize
                      + b_padded * out_dim * 4
                      + (w1a.size + w2m.size) * w1a.dtype.itemsize
                      + b2c.size * 4)

    out = pl.pallas_call(
        _policy_kernel,
        out_shape=jax.ShapeDtypeStruct((out_dim, b_padded), jnp.float32),
        grid_spec=pltpu.PrefetchScalarGridSpec(
            num_scalar_prefetch=0,
            grid=(n_tiles,),
            in_specs=[
                pl.BlockSpec((aug_in, tb), lambda i: (0, i)),    # x tile
                pl.BlockSpec((H, aug_in), lambda i: (0, 0)),     # W1|b1 resident
                pl.BlockSpec((out_dim, H), lambda i: (0, 0)),    # W2 resident
                pl.BlockSpec((out_dim, 1), lambda i: (0, 0)),    # b2 resident
            ],
            out_specs=pl.BlockSpec((out_dim, tb), lambda i: (0, i)),
        ),
        compiler_params=pltpu.CompilerParams(
            dimension_semantics=("parallel",),
            # 16K-column tile is ~14 MiB live: raise v5e's 16 MiB default
            # scoped limit, stay well under v7x's 64 MiB physical VMEM.
            vmem_limit_bytes=32 * 1024 * 1024,
        ),
        cost_estimate=pl.CostEstimate(
            flops=flops,
            transcendentals=transcendentals,
            bytes_accessed=bytes_accessed),
    )(xa, w1a, w2m, b2c)

    return out[:, :B]


def policy_network_forward(x, w1, b1, w2, b2, *, tb_max=16384,
                           matmul_dtype=jnp.bfloat16):
    """PyTorch-layout convenience wrapper (matches PolicyNetwork.forward).

    x : [B, in_dim] f32; w1: [H, in_dim]; b1: [H]; w2: [out, H]; b2: [out]
    returns probabilities [B, out] f32.
    """
    w1a, w2m, b2c = pack_params(w1, b1, w2, b2, matmul_dtype)
    xa = prepare_observations(x, matmul_dtype)
    probs_t = policy_probs_feature_major(xa, w1a, w2m, b2c, tb_max=tb_max)
    # TODO(synk): fuse greedy-action argmax / categorical sampling
    # (pltpu.prng_*) into the kernel so the output is a [1, B] int and the
    # output transpose disappears entirely for the acting path.
    return probs_t.T


# --------------------------------------------------------------------------- #
# Reference / params
# --------------------------------------------------------------------------- #
def init_params(key, input_dim, hidden_dim, output_dim):
    """kaiming_normal_ (fan_in, gain=sqrt(2)) weights, zero biases — matching
    PolicyNetwork._initialize_weights. PyTorch [out, in] layout."""
    k1, k2 = jax.random.split(key)
    std1 = (2.0 / input_dim) ** 0.5
    std2 = (2.0 / hidden_dim) ** 0.5
    w1 = jax.random.normal(k1, (hidden_dim, input_dim), jnp.float32) * std1
    w2 = jax.random.normal(k2, (output_dim, hidden_dim), jnp.float32) * std2
    b1 = jnp.zeros((hidden_dim,), jnp.float32)
    b2 = jnp.zeros((output_dim,), jnp.float32)
    return w1, b1, w2, b2


def reference(x, w1, b1, w2, b2, matmul_dtype=jnp.bfloat16):
    """Pure-JAX reference at the same bf16-MXU / f32-accumulate precision."""
    xb = x.astype(matmul_dtype)
    h = jnp.maximum(
        jnp.dot(xb, w1.T.astype(matmul_dtype),
                preferred_element_type=jnp.float32) + b1, 0.0)
    logits = jnp.dot(h.astype(matmul_dtype), w2.T.astype(matmul_dtype),
                     preferred_element_type=jnp.float32) + b2
    return jax.nn.softmax(logits, axis=-1)


# --------------------------------------------------------------------------- #
# Demo / checks
# --------------------------------------------------------------------------- #
if __name__ == "__main__":
    # CartPole-v1: observation dim = 4, action dim = 2, hidden_dim = 128.
    input_dim, hidden_dim, output_dim = 4, 128, 2

    key = jax.random.PRNGKey(0)
    kx, kp, kx2, kb = jax.random.split(key, 4)
    w1, b1, w2, b2 = init_params(kp, input_dim, hidden_dim, output_dim)

    fwd = jax.jit(policy_network_forward,
                  static_argnames=("tb_max", "matmul_dtype"))

    # --- small batch (single 128-lane tile; like per-step policy eval) ------
    batch = 8
    x = jax.random.normal(kx, (batch, input_dim), jnp.float32)
    out = jax.block_until_ready(fwd(x, w1, b1, w2, b2))
    ref = reference(x, w1, b1, w2, b2)
    assert out.shape == (batch, output_dim)
    assert bool(jnp.all(jnp.isfinite(out)))
    assert bool(jnp.all((out >= 0.0) & (out <= 1.0)))
    assert jnp.allclose(out, ref, atol=2e-3, rtol=2e-3)
    assert jnp.allclose(jnp.sum(out, axis=-1), 1.0, atol=1e-5)

    # --- multi-tile grid: B=300 padded to 3 full 128-column tiles -----------
    batch2 = 300
    x2 = jax.random.normal(kx2, (batch2, input_dim), jnp.float32)
    out2 = jax.block_until_ready(fwd(x2, w1, b1, w2, b2, tb_max=128))
    ref2 = reference(x2, w1, b1, w2, b2)
    assert out2.shape == (batch2, output_dim)
    assert jnp.allclose(out2, ref2, atol=2e-3, rtol=2e-3)
    assert jnp.allclose(jnp.sum(out2, axis=-1), 1.0, atol=1e-5)

    # --- feature-major fast path (no wrapper transposes) --------------------
    fwd_fm = jax.jit(policy_probs_feature_major, static_argnames=("tb_max",))
    w1a, w2m, b2c = pack_params(w1, b1, w2, b2)
    xa2 = prepare_observations(x2)
    out2_fm = jax.block_until_ready(fwd_fm(xa2, w1a, w2m, b2c, tb_max=128))
    assert out2_fm.shape == (output_dim, batch2)
    assert jnp.allclose(out2_fm.T, ref2, atol=2e-3, rtol=2e-3)

    # --- nonzero biases exercise the b1-folding path -------------------------
    b1n = 0.1 * jax.random.normal(kb, (hidden_dim,), jnp.float32)
    b2n = jnp.array([0.05, -0.05], jnp.float32)
    out3 = jax.block_until_ready(fwd(x, w1, b1n, w2, b2n))
    ref3 = reference(x, w1, b1n, w2, b2n)
    assert jnp.allclose(out3, ref3, atol=5e-3, rtol=5e-3)
    assert jnp.allclose(jnp.sum(out3, axis=-1), 1.0, atol=1e-5)

    print("KERNEL_OK")
</pallas_src>

<mosaic_0001>
module attributes {stable_mosaic.version = 11 : i64} {
  func.func @_policy_kernel(%arg0: i32, %arg1: memref<5x128xbf16, #tpu.memory_space<vmem>>, %arg2: memref<128x5xbf16, #tpu.memory_space<vmem>>, %arg3: memref<2x128xbf16, #tpu.memory_space<vmem>>, %arg4: memref<2x1xf32, #tpu.memory_space<vmem>>, %arg5: memref<2x128xf32, #tpu.memory_space<vmem>>) attributes {dimension_semantics = [#tpu.dimension_semantics<parallel>], iteration_bounds = array<i64: 1>, scalar_prefetch = 0 : i64, scratch_operands = 0 : i64, tpu.core_type = #tpu.core_type<tc>, window_params = [{transform_indices = @transform_0, window_bounds = array<i64: 5, 128>}, {pipeline_mode = #tpu.pipeline_mode<synchronous>, transform_indices = @transform_1, window_bounds = array<i64: 128, 5>}, {pipeline_mode = #tpu.pipeline_mode<synchronous>, transform_indices = @transform_2, window_bounds = array<i64: 2, 128>}, {pipeline_mode = #tpu.pipeline_mode<synchronous>, transform_indices = @transform_3, window_bounds = array<i64: 2, 1>}, {transform_indices = @transform_4, window_bounds = array<i64: 2, 128>}]} {
    %c0 = arith.constant 0 : index
    %c0_0 = arith.constant 0 : index
    %0 = vector.load %arg2[%c0, %c0_0] : memref<128x5xbf16, #tpu.memory_space<vmem>>, vector<128x5xbf16>
    %c0_1 = arith.constant 0 : index
    %c0_2 = arith.constant 0 : index
    %1 = vector.load %arg1[%c0_1, %c0_2] : memref<5x128xbf16, #tpu.memory_space<vmem>>, vector<5x128xbf16>
    %cst = arith.constant dense<0.000000e+00> : vector<128x128xf32>
    %2 = tpu.matmul %0, %1, %cst {dimension_numbers = #tpu.dot_dimension_numbers<[1], [0], [0], [1], [0, 0, 1, 1], [], []>} : vector<128x5xbf16>, vector<5x128xbf16>, vector<128x128xf32> -> vector<128x128xf32>
    %3 = arith.truncf %2 : vector<128x128xf32> to vector<128x128xbf16>
    %cst_3 = arith.constant 0.000000e+00 : bf16
    %4 = vector.broadcast %cst_3 : bf16 to vector<128x128xbf16>
    %5 = arith.maximumf %3, %4 : vector<128x128xbf16>
    %c0_4 = arith.constant 0 : index
    %c0_5 = arith.constant 0 : index
    %6 = vector.load %arg3[%c0_4, %c0_5] : memref<2x128xbf16, #tpu.memory_space<vmem>>, vector<2x128xbf16>
    %cst_6 = arith.constant dense<0.000000e+00> : vector<2x128xf32>
    %7 = tpu.matmul %6, %5, %cst_6 {dimension_numbers = #tpu.dot_dimension_numbers<[1], [0], [0], [1], [0, 0, 1, 1], [], []>} : vector<2x128xbf16>, vector<128x128xbf16>, vector<2x128xf32> -> vector<2x128xf32>
    %c0_7 = arith.constant 0 : index
    %c0_8 = arith.constant 0 : index
    %8 = vector.load %arg4[%c0_7, %c0_8] : memref<2x1xf32, #tpu.memory_space<vmem>>, vector<2x1xf32>
    %9 = vector.broadcast %8 : vector<2x1xf32> to vector<2x128xf32>
    %10 = arith.addf %7, %9 : vector<2x128xf32>
    %11 = vector.extract_strided_slice %10 {offsets = [1, 0], sizes = [1, 128], strides = [1, 1]} : vector<2x128xf32> to vector<1x128xf32>
    %12 = vector.extract_strided_slice %10 {offsets = [0, 0], sizes = [1, 128], strides = [1, 1]} : vector<2x128xf32> to vector<1x128xf32>
    %13 = arith.subf %11, %12 : vector<1x128xf32>
    %cst_9 = arith.constant 0.000000e+00 : f32
    %14 = vector.broadcast %cst_9 : f32 to vector<1x128xf32>
    %15 = arith.subf %14, %13 : vector<1x128xf32>
    %16 = math.exp %15 : vector<1x128xf32>
    %cst_10 = arith.constant 1.000000e+00 : f32
    %17 = vector.broadcast %cst_10 : f32 to vector<1x128xf32>
    %18 = arith.addf %17, %16 : vector<1x128xf32>
    %cst_11 = arith.constant 1.000000e+00 : f32
    %19 = vector.broadcast %cst_11 : f32 to vector<1x128xf32>
    %20 = arith.divf %19, %18 : vector<1x128xf32>
    %cst_12 = arith.constant 1.000000e+00 : f32
    %21 = vector.broadcast %cst_12 : f32 to vector<1x128xf32>
    %22 = arith.subf %21, %20 : vector<1x128xf32>
    %c0_13 = arith.constant 0 : index
    %c0_14 = arith.constant 0 : index
    %23 = vector.load %arg5[%c0_13, %c0_14] : memref<2x128xf32, #tpu.memory_space<vmem>>, vector<1x128xf32>
    tpu.vector_store %arg5[%c0_13, %c0_14], %22 {strides = array<i32>} : memref<2x128xf32, #tpu.memory_space<vmem>>, vector<1x128xf32>,
    %c1 = arith.constant 1 : index
    %c0_15 = arith.constant 0 : index
    %24 = vector.load %arg5[%c1, %c0_15] : memref<2x128xf32, #tpu.memory_space<vmem>>, vector<1x128xf32>
    tpu.vector_store %arg5[%c1, %c0_15], %20 {strides = array<i32>} : memref<2x128xf32, #tpu.memory_space<vmem>>, vector<1x128xf32>,
    return
  }
  func.func @transform_0(%arg0: i32) -> (i32, i32) {
    %c0_i32 = arith.constant 0 : i32
    %c0_i32_0 = arith.constant 0 : i32
    return %c0_i32, %arg0 : i32, i32
  }
  func.func @transform_1(%arg0: i32) -> (i32, i32) {
    %c0_i32 = arith.constant 0 : i32
    %c0_i32_0 = arith.constant 0 : i32
    %c0_i32_1 = arith.constant 0 : i32
    return %c0_i32, %c0_i32_0 : i32, i32
  }
  func.func @transform_2(%arg0: i32) -> (i32, i32) {
    %c0_i32 = arith.constant 0 : i32
    %c0_i32_0 = arith.constant 0 : i32
    %c0_i32_1 = arith.constant 0 : i32
    return %c0_i32, %c0_i32_0 : i32, i32
  }
  func.func @transform_3(%arg0: i32) -> (i32, i32) {
    %c0_i32 = arith.constant 0 : i32
    %c0_i32_0 = arith.constant 0 : i32
    %c0_i32_1 = arith.constant 0 : i32
    return %c0_i32, %c0_i32_0 : i32, i32
  }
  func.func @transform_4(%arg0: i32) -> (i32, i32) {
    %c0_i32 = arith.constant 0 : i32
    %c0_i32_0 = arith.constant 0 : i32
    return %c0_i32, %arg0 : i32, i32
  }
}

</mosaic_0001>

<llo_original>
// kernel: policy_network_forward.1
$region0: #{policy_network_forward.1}
  #allocation0 [shape = 'u32[]', space=smem, size = 0x4, offset = 0x4, fixed_abs, tag = 'smem constant byte address 0x4 - core index']
  #allocation1 [shape = 'u32[144,128]{1,0:T(1,128)}', space=vmem, size = 0x12000, scoped, tag = 'internal scratch']
  %s0 = inlined_call_operand.vmem [shape: bf16[5,128], index: 0, kind: input, shape index: {}]
  %s1 = inlined_call_operand.vmem [shape: bf16[128,5], index: 1, kind: input, shape index: {}]
  %s2 = inlined_call_operand.vmem [shape: bf16[2,128], index: 2, kind: input, shape index: {}]
  %s3 = inlined_call_operand.vmem [shape: f32[2,1], index: 3, kind: input, shape index: {}]
  %s4 = inlined_call_operand.vmem [shape: f32[2,128], index: 4, kind: output, shape index: {}]
  %s5 = sld [smem:[#allocation0]]
  $region26: #{policy_network_forward.1} parent=0
    _
  %s7 = ssub.s32 1, %s5
  %s8 = scalar_select 0, %s7, %s5
  // Predicated region
  $region2: #{policy_network_forward.1} parent=0 // pred_check
    _
  $region3: #{policy_network_forward.1} parent=0 // pred_check_branch
    %10 = sbr.rel (0) target = $region5
  $region4: #{policy_network_forward.1} parent=0 // pred_region
    _
  $region5: #{policy_network_forward.1} parent=0 // pred_fallthru
    _
  // Predicated region
  $region6: #{policy_network_forward.1} parent=0 // pred_check
    _
  $region7: #{policy_network_forward.1} parent=0 // pred_check_branch
    %12 = sbr.rel (0) target = $region9
  $region8: #{policy_network_forward.1} parent=0 // pred_region
    _
  $region9: #{policy_network_forward.1} parent=0 // pred_fallthru
    _
  // Predicated region
  $region10: #{policy_network_forward.1} parent=0 // pred_check
    _
  $region11: #{policy_network_forward.1} parent=0 // pred_check_branch
    %14 = sbr.rel (0) target = $region13
  $region12: #{policy_network_forward.1} parent=0 // pred_region
    _
  $region13: #{policy_network_forward.1} parent=0 // pred_fallthru
    _
  // Predicated region
  $region14: #{policy_network_forward.1} parent=0 // pred_check
    _
  $region15: #{policy_network_forward.1} parent=0 // pred_check_branch
    %16 = sbr.rel (0) target = $region17
  $region16: #{policy_network_forward.1} parent=0 // pred_region
    _
  $region17: #{policy_network_forward.1} parent=0 // pred_fallthru
    _
  %v18 = vld [vmem:[%s1] sm:$0xf]
  %v19 = vld [vmem:[%s1 + $0x4] sm:$0xf]
  %v20 = vld [vmem:[%s1 + $0x8] sm:$0xf]
  %v21 = vld [vmem:[%s1 + $0xc] sm:$0xf]
  %v22 = vld [vmem:[%s1 + $0x10] sm:$0xf]
  %v23 = vld [vmem:[%s1 + $0x14] sm:$0xf]
  %v24 = vld [vmem:[%s1 + $0x18] sm:$0xf]
  %v25 = vld [vmem:[%s1 + $0x1c] sm:$0xf]
  %v26 = vld [vmem:[%s1 + $0x20] sm:$0xf]
  %v27 = vld [vmem:[%s1 + $0x24] sm:$0xf]
  %v28 = vld [vmem:[%s1 + $0x28] sm:$0xf]
  %v29 = vld [vmem:[%s1 + $0x2c] sm:$0xf]
  %v30 = vld [vmem:[%s1 + $0x30] sm:$0xf]
  %v31 = vld [vmem:[%s1 + $0x34] sm:$0xf]
  %v32 = vld [vmem:[%s1 + $0x38] sm:$0xf]
  %v33 = vld [vmem:[%s1 + $0x3c] sm:$0xf]
  %v34 = vld [vmem:[%s0] sm:$0x7]
  %v51 = vunpack.c.l.b16 %v18
  %v52 = vunpack.c.l.b16 %v19
  %v53 = vunpack.c.l.b16 %v20
  %v54 = vunpack.c.l.b16 %v21
  %v55 = vunpack.c.l.b16 %v22
  %v56 = vunpack.c.l.b16 %v23
  %v57 = vunpack.c.l.b16 %v24
  %v58 = vunpack.c.l.b16 %v25
  %v59 = vunpack.c.l.b16 %v26
  %v60 = vunpack.c.l.b16 %v27
  %v61 = vunpack.c.l.b16 %v28
  %v62 = vunpack.c.l.b16 %v29
  %v63 = vunpack.c.l.b16 %v30
  %v64 = vunpack.c.l.b16 %v31
  %v65 = vunpack.c.l.b16 %v32
  %v66 = vunpack.c.l.b16 %v33
  %v67 = vpack.c.b16 %v52, %v51
  %v68 = vpack.c.b16 %v54, %v53
  %v69 = vpack.c.b16 %v56, %v55
  %v70 = vpack.c.b16 %v58, %v57
  %v71 = vpack.c.b16 %v60, %v59
  %v72 = vpack.c.b16 %v62, %v61
  %v73 = vpack.c.b16 %v64, %v63
  %v74 = vpack.c.b16 %v66, %v65
  %vm75 = vcmask 39936
  %v77 = vsel %vm75, %v67, 0
  %v80 = vsel %vm75, %v68, 0
  %v83 = vsel %vm75, %v69, 0
  %v86 = vsel %vm75, %v70, 0
  %v89 = vsel %vm75, %v71, 0
  %v92 = vsel %vm75, %v72, 0
  %v95 = vsel %vm75, %v73, 0
  %v98 = vsel %vm75, %v74, 0
  %vm100 = vcmask 1041408
  %vm101 = vcmask 1042432
  %v102 = vsel %vm100, 4294967295, 65535
  %v103 = vsel %vm101, %v102, 0
  %v105 = vand.u32 %v34, %v103
  %107 = vmatprep.subr.bf16.mxu0 0
  %108 = vmatpush1.bf16.msra.mxu0 %v105
  %109 = vmatprep.subr.bf16.mxu0 0
  %110 = vmatpush1.bf16.msra.mxu0 0
  %111 = vmatprep.subr.bf16.mxu0 0
  %112 = vmatpush1.bf16.msra.mxu0 0
  %113 = vmatprep.subr.bf16.mxu0 0
  %114 = vmatpush1.bf16.msra.mxu0 0
  %115 = vmatprep.subr.bf16.mxu0 0
  %116 = vmatpush1.bf16.msra.mxu0 0
  %117 = vmatprep.subr.bf16.mxu0 0
  %118 = vmatpush1.bf16.msra.mxu0 0
  %119 = vmatprep.subr.bf16.mxu0 0
  %120 = vmatpush1.bf16.msra.mxu0 0
  %121 = vmatprep.subr.bf16.mxu0 0
  %122 = vmatpush1.bf16.msra.mxu0 0
  %123 = vmatprep.subr.bf16.mxu0 0
  %124 = vmatpush1.bf16.msra.mxu0 0
  %125 = vmatprep.subr.bf16.mxu0 0
  %126 = vmatpush1.bf16.msra.mxu0 0
  %127 = vmatprep.subr.bf16.mxu0 0
  %128 = vmatpush1.bf16.msra.mxu0 0
  %129 = vmatprep.subr.bf16.mxu0 0
  %130 = vmatpush1.bf16.msra.mxu0 0
  %131 = vmatprep.subr.bf16.mxu0 0
  %132 = vmatpush1.bf16.msra.mxu0 0
  %133 = vmatprep.subr.bf16.mxu0 0
  %134 = vmatpush1.bf16.msra.mxu0 0
  %135 = vmatprep.subr.bf16.mxu0 0
  %136 = vmatpush1.bf16.msra.mxu0 0
  %137 = vmatprep.subr.bf16.mxu0 0
  %138 = vmatpush1.bf16.msra.mxu0 0
  %139 = vmatprep.mubr.bf16.mxu0 0
  %140 = vmatmul.mubr.bf16.gmra.mrb[0].mxu0 %v77
  %v141 = vpop.f32.mrb[0].mxu0
  %v142 = vadd.f32 0.0, %v141
  %v143 = vpop.f32.mrb[0].mxu0
  %v144 = vpop.f32.mrb[0].mxu0
  %v145 = vadd.f32 0.0, %v144
  %v146 = vpop.f32.mrb[0].mxu0
  %147 = vmatprep.mubr.bf16.mxu0 0
  %148 = vmatmul.mubr.bf16.gmra.mrb[0].mxu0 %v80
  %v149 = vpop.f32.mrb[0].mxu0
  %v150 = vadd.f32 0.0, %v149
  %v151 = vpop.f32.mrb[0].mxu0
  %v152 = vpop.f32.mrb[0].mxu0
  %v153 = vadd.f32 0.0, %v152
  %v154 = vpop.f32.mrb[0].mxu0
  %155 = vmatprep.mubr.bf16.mxu0 0
  %156 = vmatmul.mubr.bf16.gmra.mrb[0].mxu0 %v83
  %v157 = vpop.f32.mrb[0].mxu0
  %v158 = vadd.f32 0.0, %v157
  %v159 = vpop.f32.mrb[0].mxu0
  %v160 = vpop.f32.mrb[0].mxu0
  %v161 = vadd.f32 0.0, %v160
  %v162 = vpop.f32.mrb[0].mxu0
  %163 = vmatprep.mubr.bf16.mxu0 0
  %164 = vmatmul.mubr.bf16.gmra.mrb[0].mxu0 %v86
  %v165 = vpop.f32.mrb[0].mxu0
  %v166 = vadd.f32 0.0, %v165
  %v167 = vpop.f32.mrb[0].mxu0
  %v168 = vpop.f32.mrb[0].mxu0
  %v169 = vadd.f32 0.0, %v168
  %v170 = vpop.f32.mrb[0].mxu0
  %171 = vmatprep.mubr.bf16.mxu0 0
  %172 = vmatmul.mubr.bf16.gmra.mrb[0].mxu0 %v89
  %v173 = vpop.f32.mrb[0].mxu0
  %v174 = vadd.f32 0.0, %v173
  %v175 = vpop.f32.mrb[0].mxu0
  %v176 = vpop.f32.mrb[0].mxu0
  %v177 = vadd.f32 0.0, %v176
  %v178 = vpop.f32.mrb[0].mxu0
  %179 = vmatprep.mubr.bf16.mxu0 0
  %180 = vmatmul.mubr.bf16.gmra.mrb[0].mxu0 %v92
  %v181 = vpop.f32.mrb[0].mxu0
  %v182 = vadd.f32 0.0, %v181
  %v183 = vpop.f32.mrb[0].mxu0
  %v184 = vpop.f32.mrb[0].mxu0
  %v185 = vadd.f32 0.0, %v184
  %v186 = vpop.f32.mrb[0].mxu0
  %187 = vmatprep.mubr.bf16.mxu0 0
  %188 = vmatmul.mubr.bf16.gmra.mrb[0].mxu0 %v95
  %v189 = vpop.f32.mrb[0].mxu0
  %v190 = vadd.f32 0.0, %v189
  %v191 = vpop.f32.mrb[0].mxu0
  %v192 = vpop.f32.mrb[0].mxu0
  %v193 = vadd.f32 0.0, %v192
  %v194 = vpop.f32.mrb[0].mxu0
  %195 = vmatprep.mubr.bf16.mxu0 0
  %196 = vmatmul.mubr.bf16.gmra.mrb[0].mxu0 %v98
  %v197 = vpop.f32.mrb[0].mxu0
  %v198 = vadd.f32 0.0, %v197
  %v199 = vpop.f32.mrb[0].mxu0
  %v200 = vpop.f32.mrb[0].mxu0
  %v201 = vadd.f32 0.0, %v200
  %v202 = vpop.f32.mrb[0].mxu0
  %203 = vdwg.mxu0
  %v204 = vpack.c.bf16 %v145, %v142
  %v205 = vpack.c.bf16 %v153, %v150
  %v206 = vpack.c.bf16 %v161, %v158
  %v207 = vpack.c.bf16 %v169, %v166
  %v208 = vpack.c.bf16 %v177, %v174
  %v209 = vpack.c.bf16 %v185, %v182
  %v210 = vpack.c.bf16 %v193, %v190
  %v211 = vpack.c.bf16 %v201, %v198
  %v212 = vmax.bf16 %v204, 0
  %v213 = vmax.bf16 %v205, 0
  %v214 = vmax.bf16 %v206, 0
  %v215 = vmax.bf16 %v207, 0
  %v216 = vmax.bf16 %v208, 0
  %v217 = vmax.bf16 %v209, 0
  %v218 = vmax.bf16 %v210, 0
  %v219 = vmax.bf16 %v211, 0
  %v220 = vld [vmem:[%s2] sm:$0x1]
  %v221 = vld [vmem:[%s3] sm:$0x3]
  %223 = vset.pattern.permute.xlu0 0
  %224 = vperm.xlu0 %223, %v221
  %v225 = vpop.permute.xlu0 %224
  %227 = vmatprep.subr.bf16.mxu0 0
  %228 = vmatpush1.bf16.msra.mxu0 %v212
  %229 = vmatprep.subr.bf16.mxu0 0
  %230 = vmatpush1.bf16.msra.mxu0 %v213
  %231 = vmatprep.subr.bf16.mxu0 0
  %232 = vmatpush1.bf16.msra.mxu0 %v214
  %233 = vmatprep.subr.bf16.mxu0 0
  %234 = vmatpush1.bf16.msra.mxu0 %v215
  %235 = vmatprep.subr.bf16.mxu0 0
  %236 = vmatpush1.bf16.msra.mxu0 %v216
  %237 = vmatprep.subr.bf16.mxu0 0
  %238 = vmatpush1.bf16.msra.mxu0 %v217
  %239 = vmatprep.subr.bf16.mxu0 0
  %240 = vmatpush1.bf16.msra.mxu0 %v218
  %241 = vmatprep.subr.bf16.mxu0 0
  %242 = vmatpush1.bf16.msra.mxu0 %v219
  %243 = vmatprep.subr.bf16.mxu0 0
  %244 = vmatpush1.bf16.msra.mxu0 0
  %245 = vmatprep.subr.bf16.mxu0 0
  %246 = vmatpush1.bf16.msra.mxu0 0
  %247 = vmatprep.subr.bf16.mxu0 0
  %248 = vmatpush1.bf16.msra.mxu0 0
  %249 = vmatprep.subr.bf16.mxu0 0
  %250 = vmatpush1.bf16.msra.mxu0 0
  %251 = vmatprep.subr.bf16.mxu0 0
  %252 = vmatpush1.bf16.msra.mxu0 0
  %253 = vmatprep.subr.bf16.mxu0 0
  %254 = vmatpush1.bf16.msra.mxu0 0
  %255 = vmatprep.subr.bf16.mxu0 0
  %256 = vmatpush1.bf16.msra.mxu0 0
  %257 = vmatprep.subr.bf16.mxu0 0
  %258 = vmatpush1.bf16.msra.mxu0 0
  %259 = vmatprep.mubr.bf16.mxu0 0
  %260 = vmatmul.mubr.bf16.gmra.mrb[0].mxu0 %v220
  %v261 = vpop.f32.mrb[0].mxu0
  %v262 = vadd.f32 %v225, %v261
  %v263 = vpop.f32.mrb[0].mxu0
  %v264 = vpop.f32.mrb[0].mxu0
  %v265 = vpop.f32.mrb[0].mxu0
  %266 = vdwg.mxu0
  %v268 = vrot.slane %v262, 7
  %v270 = vsub.f32 %v262, %v268
  %v271 = vsub.f32 0.0, %v270
  %v272 = vmul.f32 %v271, 1.442695
  %v273 = vpow.pop %v272
  %v274 = vadd.f32 %v273, 1.0
  %v275 = vrcp.pop %v274
  %v276 = vmul.f32 1.0, %v275
  %v277 = vsub.f32 1.0, %v276
  %278 = vst [vmem:[%s4 - $0x1] sm:$0x2] %v277
  %279 = vst [vmem:[%s4] sm:$0x2] %v276
  // Predicated region
  $region18: #{policy_network_forward.1} parent=0 // pred_check
    _
  $region19: #{policy_network_forward.1} parent=0 // pred_check_branch
    %281 = sbr.rel (0) target = $region21
  $region20: #{policy_network_forward.1} parent=0 // pred_region
    _
  $region21: #{policy_network_forward.1} parent=0 // pred_fallthru
    _
  // Predicated region
  $region22: #{policy_network_forward.1} parent=0 // pred_check
    _
  $region23: #{policy_network_forward.1} parent=0 // pred_check_branch
    %283 = sbr.rel (0) target = $region25
  $region24: #{policy_network_forward.1} parent=0 // pred_region
    _
  $region25: #{policy_network_forward.1} parent=0 // pred_fallthru
    _

</llo_original>
